<compile_context>
chip_gen: v6e
topology: v6e:2x2x1
jax: 0.10.0
libtpu: 0.0.40
codegen_flags: <defaults>
</compile_context>

<pallas_src>
import jax
import jax.numpy as jnp
from jax import lax
from jax.experimental import pallas as pl
from jax.experimental.pallas import tpu as pltpu


def _round_up(x, m):
    return ((x + m - 1) // m) * m


# ----------------------------------------------------------------------------
# Fused kernel: state projections + query formation + masked attention readout
# ----------------------------------------------------------------------------
def _fused_attn_kernel(qpre_ref, eh_ref, maskb_ref, hcat_ref, ccat_ref,
                       wh_ref, wc_ref, wa_ref, wcp_ref, wqp_ref, out_ref):
    f32 = jnp.float32
    bf16 = jnp.bfloat16
    bt, Tp, H = qpre_ref.shape
    S = eh_ref.shape[1]
    H2 = eh_ref.shape[2]
    Hp = out_ref.shape[2]
    cdn = (((1,), (1,)), ((), ()))   # contract x's last axis with W's in-features

    # --- fused enc_hidden_proj / enc_cell_proj: h0/c0 stay in VMEM ------------
    hc = hcat_ref[...][:, 0, :]                                    # [bt, 4H] bf16
    cc = ccat_ref[...][:, 0, :]
    h0 = lax.dot_general(hc, wh_ref[...], cdn, preferred_element_type=f32)
    c0 = lax.dot_general(cc, wc_ref[...], cdn, preferred_element_type=f32)
    state = (h0 + c0)[:, None, :]                                  # [bt, 1, H] f32

    # --- decoder query formation (f32 elementwise / EUP, v5e-safe) ------------
    q = jnp.tanh(qpre_ref[...] + state)                            # [bt, Tp, H] f32
    q_bf = q.astype(bf16)

    # --- attention_proj folded in (layout-preserving merge: S % 8 == 0) -------
    eh = eh_ref[...]                                               # [bt, S, 2H] bf16
    ea = lax.dot_general(eh.reshape(bt * S, H2), wa_ref[...], cdn,
                         preferred_element_type=f32).reshape(bt, S, H)
    ea_bf = ea.astype(bf16)

    # --- scores (bf16 MXU, f32 acc) + additive mask + f32 softmax -------------
    scores = jnp.einsum('bth,bsh->bts', q_bf, ea_bf,
                        preferred_element_type=f32)                # [bt, Tp, S]
    scores = scores + maskb_ref[...]                               # [bt, 1, S] bcast
    scores = scores - jnp.max(scores, axis=-1, keepdims=True)
    p = jnp.exp(scores)
    alpha = p * pl.reciprocal(jnp.sum(p, axis=-1, keepdims=True), approx=False)

    # --- context (bf16 MXU, f32 acc) -------------------------------------------
    ctx = jnp.einsum('bts,bsh->bth', alpha.astype(bf16), eh,
                     preferred_element_type=f32)                   # [bt, Tp, 2H]

    # --- output combine, lane-dense (Hp is a multiple of 128) ------------------
    comb = lax.dot_general(ctx.astype(bf16).reshape(bt * Tp, H2), wcp_ref[...],
                           cdn, preferred_element_type=f32)
    comb = comb + lax.dot_general(q_bf.reshape(bt * Tp, H), wqp_ref[...],
                                  cdn, preferred_element_type=f32)
    out_ref[...] = jnp.tanh(comb).reshape(bt, Tp, Hp).astype(out_ref.dtype)


def fused_attention_decoder(q_pre, enc_hiddens, enc_masks, hidden_cat, cell_cat,
                            w_hproj, w_cproj, w_aproj, w_out_ctx, w_out_q):
    """q_pre: [T,B,H] pre-activation decoder queries; enc_hiddens: [S,B,2H];
    enc_masks: [S,B] (1.0 at padded positions). Returns dec_outputs [T,B,H]."""
    T, B, H = q_pre.shape
    S = enc_hiddens.shape[0]
    H2 = enc_hiddens.shape[2]
    H4 = hidden_cat.shape[1]
    bf16 = jnp.bfloat16

    Tp = _round_up(T, 8)      # sublane-aligned -> in-kernel flattens are layout-preserving
    Hp = _round_up(H, 128)    # lane-dense output stores

    # batch-major, padded, bf16 views (one-time cheap XLA transposes/pads)
    q_pre_bt = jnp.transpose(q_pre, (1, 0, 2))                        # [B, T, H] f32
    q_pre_bt = jnp.pad(q_pre_bt, ((0, 0), (0, Tp - T), (0, 0)))
    eh_bt = jnp.transpose(enc_hiddens, (1, 0, 2)).astype(bf16)        # [B, S, 2H]
    mask_bias = (enc_masks.T * jnp.float32(-1e9))[:, None, :]         # [B, 1, S] f32
    hcat3 = hidden_cat[:, None, :].astype(bf16)                       # [B, 1, 4H]
    ccat3 = cell_cat[:, None, :].astype(bf16)

    wh = w_hproj.astype(bf16)                                         # [H, 4H]
    wc = w_cproj.astype(bf16)
    wa = w_aproj.astype(bf16)                                         # [H, 2H]
    wcp = jnp.pad(w_out_ctx, ((0, Hp - H), (0, 0))).astype(bf16)      # [Hp, 2H]
    wqp = jnp.pad(w_out_q, ((0, Hp - H), (0, 0))).astype(bf16)        # [Hp, H]

    # grid over batch: >=2 programs when possible so both v7x TCs do work;
    # also enables BlockSpec input/output pipelining on v5e/v6e.
    b_tile = B // 2 if (B >= 2 and B % 2 == 0) else B
    grid = (B // b_tile,)

    flops = 2 * B * (2 * H4 * H + S * H2 * H + Tp * H * S
                     + Tp * S * H2 + Tp * H2 * Hp + Tp * H * Hp)
    transcendentals = B * Tp * (S + H + Hp)
    bytes_accessed = (q_pre_bt.size * 4 + eh_bt.size * 2 + mask_bias.size * 4
                      + hcat3.size * 2 + ccat3.size * 2
                      + (wh.size + wc.size + wa.size + wcp.size + wqp.size) * 2
                      + B * Tp * Hp * 4)

    out_p = pl.pallas_call(
        _fused_attn_kernel,
        out_shape=jax.ShapeDtypeStruct((B, Tp, Hp), jnp.float32),
        grid=grid,
        in_specs=[
            pl.BlockSpec((b_tile, Tp, H), lambda i: (i, 0, 0)),    # q_pre
            pl.BlockSpec((b_tile, S, H2), lambda i: (i, 0, 0)),    # enc_hiddens
            pl.BlockSpec((b_tile, 1, S),  lambda i: (i, 0, 0)),    # additive mask bias
            pl.BlockSpec((b_tile, 1, H4), lambda i: (i, 0, 0)),    # hidden_cat
            pl.BlockSpec((b_tile, 1, H4), lambda i: (i, 0, 0)),    # cell_cat
            pl.BlockSpec((H, H4),  lambda i: (0, 0)),              # W_hproj
            pl.BlockSpec((H, H4),  lambda i: (0, 0)),              # W_cproj
            pl.BlockSpec((H, H2),  lambda i: (0, 0)),              # W_aproj
            pl.BlockSpec((Hp, H2), lambda i: (0, 0)),              # W_out_ctx (padded)
            pl.BlockSpec((Hp, H),  lambda i: (0, 0)),              # W_out_q (padded)
        ],
        out_specs=pl.BlockSpec((b_tile, Tp, Hp), lambda i: (i, 0, 0)),
        compiler_params=pltpu.CompilerParams(
            dimension_semantics=("parallel",),
            vmem_limit_bytes=32 * 1024 * 1024),
        cost_estimate=pl.CostEstimate(flops=flops,
                                      transcendentals=transcendentals,
                                      bytes_accessed=bytes_accessed),
    )(q_pre_bt, eh_bt, mask_bias, hcat3, ccat3, wh, wc, wa, wcp, wqp)

    # strip T/H padding, back to [T, B, H]
    return jnp.transpose(out_p[:, :T, :H], (1, 0, 2))


# ----------------------------------------------------------------------------
# make_masks — faithful to the reference: src is an [S, B] tensor, so every row
# "length" equals B and nothing ends up masked (mask is all zeros).
# ----------------------------------------------------------------------------
def make_masks(src, src_len, batch_size):
    src_lengths = jnp.array([s.shape[0] for s in src], dtype=jnp.int32)   # [S]
    col = jnp.arange(batch_size, dtype=jnp.int32)[None, :]
    return (col >= src_lengths[:src_len, None]).astype(jnp.float32)        # [S, B]


# ----------------------------------------------------------------------------
# Parameters (deterministic, in-script)
# ----------------------------------------------------------------------------
def init_params(key, vocab=16, d_emb=16, H=32):
    ks = jax.random.split(key, 11)

    def w(k, shape):
        return (0.1 * jax.random.normal(k, shape)).astype(jnp.float32)

    return dict(
        # encoder stand-in
        E_src=w(ks[0], (vocab, d_emb)),
        W_enc=w(ks[1], (d_emb, 2 * H)),
        W_h=w(ks[2], (4, 2 * H, H)),
        W_c=w(ks[3], (4, 2 * H, H)),
        # Seq2Seq's own parameters (shapes from __init__)
        W_hproj=w(ks[4], (H, 4 * H)),   # nn.Linear(hidden_dim*4, hidden_dim, bias=False)
        W_cproj=w(ks[5], (H, 4 * H)),   # nn.Linear(hidden_dim*4, hidden_dim, bias=False)
        W_aproj=w(ks[6], (H, 2 * H)),   # nn.Linear(hidden_dim*2, hidden_dim, bias=False)
        # decoder stand-in
        E_trg=w(ks[7], (vocab, d_emb)),
        W_q=w(ks[8], (d_emb, H)),
        W_out_q=w(ks[9], (H, H)),
        W_out_ctx=w(ks[10], (H, 2 * H)),
    )


# ----------------------------------------------------------------------------
# Seq2Seq.forward
# ----------------------------------------------------------------------------
def seq2seq_forward(params, src, trg):
    # TODO(synk): the reference `encoder` module is not defined in the source; a
    # deterministic feed-forward stand-in produces the shapes forward() expects.
    emb = params["E_src"][src]                                    # [S, B, De]
    enc_hiddens = jnp.tanh(emb @ params["W_enc"])                 # [S, B, 2H]
    pooled = jnp.mean(enc_hiddens, axis=0)                        # [B, 2H]
    hidden = jnp.stack([jnp.tanh(pooled @ params["W_h"][k]) for k in range(4)], 0)
    cell = jnp.stack([jnp.tanh(pooled @ params["W_c"][k]) for k in range(4)], 0)

    S, B, _ = enc_hiddens.shape
    enc_masks = make_masks(src, S, B)                             # [S, B]

    hidden_cat = jnp.concatenate([hidden[0], hidden[1], hidden[2], hidden[3]], axis=1)
    cell_cat = jnp.concatenate([cell[0], cell[1], cell[2], cell[3]], axis=1)

    # TODO(synk): the reference `decoder` (LSTM) module is not defined in the
    # source; decoder queries are a deterministic function of trg embeddings and
    # the projected initial state. Only the embedding projection stays in XLA —
    # the enc_hidden_proj/enc_cell_proj linears, the +h0+c0+tanh query formation,
    # attention_proj, masked softmax, context and output combine all run in the
    # single fused Pallas kernel. attention_weight is not materialized (discarded).
    trg_emb = params["E_trg"][trg]                                # [T, B, De]
    q_pre = trg_emb @ params["W_q"]                               # [T, B, H]

    return fused_attention_decoder(q_pre, enc_hiddens, enc_masks,
                                   hidden_cat, cell_cat,
                                   params["W_hproj"], params["W_cproj"],
                                   params["W_aproj"],
                                   params["W_out_ctx"], params["W_out_q"])   # [T, B, H]


if __name__ == "__main__":
    key = jax.random.PRNGKey(0)
    k_params, k_src, k_trg = jax.random.split(key, 3)

    S, T, B, H, vocab, d_emb = 8, 6, 4, 32, 16, 16
    params = init_params(k_params, vocab=vocab, d_emb=d_emb, H=H)

    src = jax.random.randint(k_src, (S, B), 0, vocab)  # [src_len, batch]
    trg = jax.random.randint(k_trg, (T, B), 0, vocab)  # [trg_len, batch]

    dec_outputs = seq2seq_forward(params, src, trg)
    dec_outputs = jax.block_until_ready(dec_outputs)

    assert dec_outputs.shape == (T, B, H)
    assert bool(jnp.all(jnp.isfinite(dec_outputs)))
    print("KERNEL_OK")
</pallas_src>

<mosaic_0001>
module attributes {stable_mosaic.version = 11 : i64} {
  func.func @_fused_attn_kernel(%arg0: i32, %arg1: memref<2x8x32xf32, #tpu.memory_space<vmem>>, %arg2: memref<2x8x64xbf16, #tpu.memory_space<vmem>>, %arg3: memref<2x1x8xf32, #tpu.memory_space<vmem>>, %arg4: memref<2x1x128xbf16, #tpu.memory_space<vmem>>, %arg5: memref<2x1x128xbf16, #tpu.memory_space<vmem>>, %arg6: memref<32x128xbf16, #tpu.memory_space<vmem>>, %arg7: memref<32x128xbf16, #tpu.memory_space<vmem>>, %arg8: memref<32x64xbf16, #tpu.memory_space<vmem>>, %arg9: memref<128x64xbf16, #tpu.memory_space<vmem>>, %arg10: memref<128x32xbf16, #tpu.memory_space<vmem>>, %arg11: memref<2x8x128xf32, #tpu.memory_space<vmem>>) attributes {dimension_semantics = [#tpu.dimension_semantics<parallel>], iteration_bounds = array<i64: 2>, scalar_prefetch = 0 : i64, scratch_operands = 0 : i64, tpu.core_type = #tpu.core_type<tc>, window_params = [{transform_indices = @transform_0, window_bounds = array<i64: 2, 8, 32>}, {transform_indices = @transform_1, window_bounds = array<i64: 2, 8, 64>}, {transform_indices = @transform_2, window_bounds = array<i64: 2, 1, 8>}, {transform_indices = @transform_3, window_bounds = array<i64: 2, 1, 128>}, {transform_indices = @transform_4, window_bounds = array<i64: 2, 1, 128>}, {pipeline_mode = #tpu.pipeline_mode<synchronous>, transform_indices = @transform_5, window_bounds = array<i64: 32, 128>}, {pipeline_mode = #tpu.pipeline_mode<synchronous>, transform_indices = @transform_6, window_bounds = array<i64: 32, 128>}, {pipeline_mode = #tpu.pipeline_mode<synchronous>, transform_indices = @transform_7, window_bounds = array<i64: 32, 64>}, {pipeline_mode = #tpu.pipeline_mode<synchronous>, transform_indices = @transform_8, window_bounds = array<i64: 128, 64>}, {pipeline_mode = #tpu.pipeline_mode<synchronous>, transform_indices = @transform_9, window_bounds = array<i64: 128, 32>}, {transform_indices = @transform_10, window_bounds = array<i64: 2, 8, 128>}]} {
    %c0 = arith.constant 0 : index
    %c0_0 = arith.constant 0 : index
    %c0_1 = arith.constant 0 : index
    %0 = vector.load %arg4[%c0, %c0_0, %c0_1] : memref<2x1x128xbf16, #tpu.memory_space<vmem>>, vector<2x1x128xbf16>
    %1 = vector.shape_cast %0 : vector<2x1x128xbf16> to vector<2x128xbf16>
    %c0_2 = arith.constant 0 : index
    %c0_3 = arith.constant 0 : index
    %c0_4 = arith.constant 0 : index
    %2 = vector.load %arg5[%c0_2, %c0_3, %c0_4] : memref<2x1x128xbf16, #tpu.memory_space<vmem>>, vector<2x1x128xbf16>
    %3 = vector.shape_cast %2 : vector<2x1x128xbf16> to vector<2x128xbf16>
    %c0_5 = arith.constant 0 : index
    %c0_6 = arith.constant 0 : index
    %4 = vector.load %arg6[%c0_5, %c0_6] : memref<32x128xbf16, #tpu.memory_space<vmem>>, vector<32x128xbf16>
    %cst = arith.constant dense<0.000000e+00> : vector<2x32xf32>
    %5 = tpu.matmul %1, %4, %cst {dimension_numbers = #tpu.dot_dimension_numbers<[1], [1], [0], [0], [0, 0, 1, 0], [], []>} : vector<2x128xbf16>, vector<32x128xbf16>, vector<2x32xf32> -> vector<2x32xf32>
    %c0_7 = arith.constant 0 : index
    %c0_8 = arith.constant 0 : index
    %6 = vector.load %arg7[%c0_7, %c0_8] : memref<32x128xbf16, #tpu.memory_space<vmem>>, vector<32x128xbf16>
    %cst_9 = arith.constant dense<0.000000e+00> : vector<2x32xf32>
    %7 = tpu.matmul %3, %6, %cst_9 {dimension_numbers = #tpu.dot_dimension_numbers<[1], [1], [0], [0], [0, 0, 1, 0], [], []>} : vector<2x128xbf16>, vector<32x128xbf16>, vector<2x32xf32> -> vector<2x32xf32>
    %8 = arith.addf %5, %7 : vector<2x32xf32>
    %9 = vector.shape_cast %8 : vector<2x32xf32> to vector<2x1x32xf32>
    %c0_10 = arith.constant 0 : index
    %c0_11 = arith.constant 0 : index
    %c0_12 = arith.constant 0 : index
    %10 = vector.load %arg1[%c0_10, %c0_11, %c0_12] : memref<2x8x32xf32, #tpu.memory_space<vmem>>, vector<2x8x32xf32>
    %11 = vector.broadcast %9 : vector<2x1x32xf32> to vector<2x8x32xf32>
    %12 = arith.addf %10, %11 : vector<2x8x32xf32>
    %13 = math.tanh %12 : vector<2x8x32xf32>
    %14 = arith.truncf %13 : vector<2x8x32xf32> to vector<2x8x32xbf16>
    %c0_13 = arith.constant 0 : index
    %c0_14 = arith.constant 0 : index
    %c0_15 = arith.constant 0 : index
    %15 = vector.load %arg2[%c0_13, %c0_14, %c0_15] : memref<2x8x64xbf16, #tpu.memory_space<vmem>>, vector<2x8x64xbf16>
    %16 = vector.shape_cast %15 : vector<2x8x64xbf16> to vector<16x64xbf16>
    %c0_16 = arith.constant 0 : index
    %c0_17 = arith.constant 0 : index
    %17 = vector.load %arg8[%c0_16, %c0_17] : memref<32x64xbf16, #tpu.memory_space<vmem>>, vector<32x64xbf16>
    %cst_18 = arith.constant dense<0.000000e+00> : vector<16x32xf32>
    %18 = tpu.matmul %16, %17, %cst_18 {dimension_numbers = #tpu.dot_dimension_numbers<[1], [1], [0], [0], [0, 0, 1, 0], [], []>} : vector<16x64xbf16>, vector<32x64xbf16>, vector<16x32xf32> -> vector<16x32xf32>
    %19 = vector.shape_cast %18 : vector<16x32xf32> to vector<2x8x32xf32>
    %20 = arith.truncf %19 : vector<2x8x32xf32> to vector<2x8x32xbf16>
    "tpu.trace_start"() <{level = 10 : i32, message = "bth,bsh->bts"}> : () -> ()
    %cst_19 = arith.constant dense<0.000000e+00> : vector<2x8x8xf32>
    %21 = tpu.matmul %14, %20, %cst_19 {dimension_numbers = #tpu.dot_dimension_numbers<[2], [2], [1], [1], [0, 0, 0, 1, 1, 1], [0], [0]>} : vector<2x8x32xbf16>, vector<2x8x32xbf16>, vector<2x8x8xf32> -> vector<2x8x8xf32>
    "tpu.trace_stop"() : () -> ()
    %c0_20 = arith.constant 0 : index
    %c0_21 = arith.constant 0 : index
    %c0_22 = arith.constant 0 : index
    %22 = vector.load %arg3[%c0_20, %c0_21, %c0_22] : memref<2x1x8xf32, #tpu.memory_space<vmem>>, vector<2x1x8xf32>
    %23 = vector.broadcast %22 : vector<2x1x8xf32> to vector<2x8x8xf32>
    %24 = arith.addf %21, %23 : vector<2x8x8xf32>
    %cst_23 = arith.constant dense<0xFF800000> : vector<2x8xf32>
    %25 = vector.multi_reduction <maximumf>, %24, %cst_23 [2] : vector<2x8x8xf32> to vector<2x8xf32>
    %26 = vector.shape_cast %25 : vector<2x8xf32> to vector<2x8x1xf32>
    %27 = vector.broadcast %26 : vector<2x8x1xf32> to vector<2x8x8xf32>
    %28 = arith.subf %24, %27 : vector<2x8x8xf32>
    %29 = math.exp %28 : vector<2x8x8xf32>
    %cst_24 = arith.constant dense<0.000000e+00> : vector<2x8xf32>
    %30 = vector.multi_reduction <add>, %29, %cst_24 [2] : vector<2x8x8xf32> to vector<2x8xf32>
    %31 = vector.shape_cast %30 : vector<2x8xf32> to vector<2x8x1xf32>
    %32 = tpu.reciprocal %31 : vector<2x8x1xf32> -> vector<2x8x1xf32>
    %33 = vector.broadcast %32 : vector<2x8x1xf32> to vector<2x8x8xf32>
    %34 = arith.mulf %29, %33 : vector<2x8x8xf32>
    %35 = arith.truncf %34 : vector<2x8x8xf32> to vector<2x8x8xbf16>
    "tpu.trace_start"() <{level = 10 : i32, message = "bts,bsh->bth"}> : () -> ()
    %cst_25 = arith.constant dense<0.000000e+00> : vector<2x8x64xf32>
    %36 = tpu.matmul %35, %15, %cst_25 {dimension_numbers = #tpu.dot_dimension_numbers<[2], [1], [1], [2], [0, 0, 0, 1, 1, 2], [0], [0]>} : vector<2x8x8xbf16>, vector<2x8x64xbf16>, vector<2x8x64xf32> -> vector<2x8x64xf32>
    "tpu.trace_stop"() : () -> ()
    %37 = arith.truncf %36 : vector<2x8x64xf32> to vector<2x8x64xbf16>
    %38 = vector.shape_cast %37 : vector<2x8x64xbf16> to vector<16x64xbf16>
    %c0_26 = arith.constant 0 : index
    %c0_27 = arith.constant 0 : index
    %39 = vector.load %arg9[%c0_26, %c0_27] : memref<128x64xbf16, #tpu.memory_space<vmem>>, vector<128x64xbf16>
    %cst_28 = arith.constant dense<0.000000e+00> : vector<16x128xf32>
    %40 = tpu.matmul %38, %39, %cst_28 {dimension_numbers = #tpu.dot_dimension_numbers<[1], [1], [0], [0], [0, 0, 1, 0], [], []>} : vector<16x64xbf16>, vector<128x64xbf16>, vector<16x128xf32> -> vector<16x128xf32>
    %41 = vector.shape_cast %14 : vector<2x8x32xbf16> to vector<16x32xbf16>
    %c0_29 = arith.constant 0 : index
    %c0_30 = arith.constant 0 : index
    %42 = vector.load %arg10[%c0_29, %c0_30] : memref<128x32xbf16, #tpu.memory_space<vmem>>, vector<128x32xbf16>
    %cst_31 = arith.constant dense<0.000000e+00> : vector<16x128xf32>
    %43 = tpu.matmul %41, %42, %cst_31 {dimension_numbers = #tpu.dot_dimension_numbers<[1], [1], [0], [0], [0, 0, 1, 0], [], []>} : vector<16x32xbf16>, vector<128x32xbf16>, vector<16x128xf32> -> vector<16x128xf32>
    %44 = arith.addf %40, %43 : vector<16x128xf32>
    %45 = math.tanh %44 : vector<16x128xf32>
    %46 = vector.shape_cast %45 : vector<16x128xf32> to vector<2x8x128xf32>
    %c0_32 = arith.constant 0 : index
    %c0_33 = arith.constant 0 : index
    %c0_34 = arith.constant 0 : index
    %47 = vector.load %arg11[%c0_32, %c0_33, %c0_34] : memref<2x8x128xf32, #tpu.memory_space<vmem>>, vector<2x8x128xf32>
    tpu.vector_store %arg11[%c0_32, %c0_33, %c0_34], %46 {strides = array<i32>} : memref<2x8x128xf32, #tpu.memory_space<vmem>>, vector<2x8x128xf32>,
    return
  }
  func.func @transform_0(%arg0: i32) -> (i32, i32, i32) {
    %c0_i32 = arith.constant 0 : i32
    %c0_i32_0 = arith.constant 0 : i32
    %c0_i32_1 = arith.constant 0 : i32
    return %arg0, %c0_i32, %c0_i32_0 : i32, i32, i32
  }
  func.func @transform_1(%arg0: i32) -> (i32, i32, i32) {
    %c0_i32 = arith.constant 0 : i32
    %c0_i32_0 = arith.constant 0 : i32
    %c0_i32_1 = arith.constant 0 : i32
    return %arg0, %c0_i32, %c0_i32_0 : i32, i32, i32
  }
  func.func @transform_2(%arg0: i32) -> (i32, i32, i32) {
    %c0_i32 = arith.constant 0 : i32
    %c0_i32_0 = arith.constant 0 : i32
    %c0_i32_1 = arith.constant 0 : i32
    return %arg0, %c0_i32, %c0_i32_0 : i32, i32, i32
  }
  func.func @transform_3(%arg0: i32) -> (i32, i32, i32) {
    %c0_i32 = arith.constant 0 : i32
    %c0_i32_0 = arith.constant 0 : i32
    %c0_i32_1 = arith.constant 0 : i32
    return %arg0, %c0_i32, %c0_i32_0 : i32, i32, i32
  }
  func.func @transform_4(%arg0: i32) -> (i32, i32, i32) {
    %c0_i32 = arith.constant 0 : i32
    %c0_i32_0 = arith.constant 0 : i32
    %c0_i32_1 = arith.constant 0 : i32
    return %arg0, %c0_i32, %c0_i32_0 : i32, i32, i32
  }
  func.func @transform_5(%arg0: i32) -> (i32, i32) {
    %c0_i32 = arith.constant 0 : i32
    %c0_i32_0 = arith.constant 0 : i32
    %c0_i32_1 = arith.constant 0 : i32
    return %c0_i32, %c0_i32_0 : i32, i32
  }
  func.func @transform_6(%arg0: i32) -> (i32, i32) {
    %c0_i32 = arith.constant 0 : i32
    %c0_i32_0 = arith.constant 0 : i32
    %c0_i32_1 = arith.constant 0 : i32
    return %c0_i32, %c0_i32_0 : i32, i32
  }
  func.func @transform_7(%arg0: i32) -> (i32, i32) {
    %c0_i32 = arith.constant 0 : i32
    %c0_i32_0 = arith.constant 0 : i32
    %c0_i32_1 = arith.constant 0 : i32
    return %c0_i32, %c0_i32_0 : i32, i32
  }
  func.func @transform_8(%arg0: i32) -> (i32, i32) {
    %c0_i32 = arith.constant 0 : i32
    %c0_i32_0 = arith.constant 0 : i32
    %c0_i32_1 = arith.constant 0 : i32
    return %c0_i32, %c0_i32_0 : i32, i32
  }
  func.func @transform_9(%arg0: i32) -> (i32, i32) {
    %c0_i32 = arith.constant 0 : i32
    %c0_i32_0 = arith.constant 0 : i32
    %c0_i32_1 = arith.constant 0 : i32
    return %c0_i32, %c0_i32_0 : i32, i32
  }
  func.func @transform_10(%arg0: i32) -> (i32, i32, i32) {
    %c0_i32 = arith.constant 0 : i32
    %c0_i32_0 = arith.constant 0 : i32
    %c0_i32_1 = arith.constant 0 : i32
    return %arg0, %c0_i32, %c0_i32_0 : i32, i32, i32
  }
}

</mosaic_0001>

<llo_original>
// kernel: tpu_custom_call.1
$region0: #{tpu_custom_call.1}
  #allocation0 [shape = 'u32[]', space=smem, size = 0x4, offset = 0x4, fixed_abs, tag = 'smem constant byte address 0x4 - core index']
  #allocation1 [shape = 'u32[144,128]{1,0:T(1,128)}', space=vmem, size = 0x12000, scoped, tag = 'internal scratch']
  %s0 = inlined_call_operand.vmem [shape: f32[4,8,32], index: 0, kind: input, shape index: {}]
  %s1 = inlined_call_operand.vmem [shape: bf16[4,8,64], index: 1, kind: input, shape index: {}]
  %s2 = inlined_call_operand.vmem [shape: f32[4,1,8], index: 2, kind: input, shape index: {}]
  %s3 = inlined_call_operand.vmem [shape: bf16[4,1,128], index: 3, kind: input, shape index: {}]
  %s4 = inlined_call_operand.vmem [shape: bf16[4,1,128], index: 4, kind: input, shape index: {}]
  %s5 = inlined_call_operand.vmem [shape: bf16[32,128], index: 5, kind: input, shape index: {}]
  %s6 = inlined_call_operand.vmem [shape: bf16[32,128], index: 6, kind: input, shape index: {}]
  %s7 = inlined_call_operand.vmem [shape: bf16[32,64], index: 7, kind: input, shape index: {}]
  %s8 = inlined_call_operand.vmem [shape: bf16[128,64], index: 8, kind: input, shape index: {}]
  %s9 = inlined_call_operand.vmem [shape: bf16[128,32], index: 9, kind: input, shape index: {}]
  %s10 = inlined_call_operand.hbm [shape: f32[4,8,128], index: 10, kind: output, shape index: {}]
  %s11 = sld [smem:[#allocation0]]
  $region73: #{tpu_custom_call.1} parent=0
    _
  %s13 = ssub.s32 1, %s11
  %s14 = scalar_select 0, %s13, %s11
  $region1: #{tpu_custom_call.1} parent=0
    #allocation2 [shape = 'u8[16384]{0}', space=vmem, size = 0x4000, scoped, tag = 'output window, operand 0']
    #allocation3 [shape = 's32[2]{0}', space=sflag, size = 0x8, scoped, tag = 'scoped memory for tpu_custom_call.1']
    %15 = vsyncpa [#allocation3], 0
    %s16 = scalar_lea.sflag [#allocation3], 1
    %17 = vsyncpa %s16, 0
    loop: start=0, step=1, limit=4
    $region2: #{tpu_custom_call.1} parent=1 // loop_pre_header
      _
    $region3: #{tpu_custom_call.1} parent=1 // loop_header
      %s19 = sphi 0, %s23
      %p20 = scmp.ge.s32.totalorder %s19, 4
      %s29 = sphi 0, %s31
      %s32 = sphi 0, %s29
      %s33 = sphi 0, %s32
      %s49 = sphi 0, %s33
      %s55 = sphi 0, %s57
      %s58 = sphi 0, %s55
      %s59 = sphi 0, %s58
      %s75 = sphi 0, %s59
      %s81 = sphi 0, %s83
      %s84 = sphi 0, %s81
      %s85 = sphi 0, %s84
      %s101 = sphi 0, %s85
      %s107 = sphi 0, %s109
      %s110 = sphi 0, %s107
      %s111 = sphi 0, %s110
      %s127 = sphi 0, %s111
      %s133 = sphi 0, %s135
      %s136 = sphi 0, %s133
      %s137 = sphi 0, %s136
      %s153 = sphi 0, %s137
      %s157 = sphi 0, %s157
      %s159 = sphi 0, %s157
      %s160 = sphi 0, %s159
      %s174 = sphi 0, %s160
      %s178 = sphi 0, %s178
      %s180 = sphi 0, %s178
      %s181 = sphi 0, %s180
      %s195 = sphi 0, %s181
      %s199 = sphi 0, %s199
      %s201 = sphi 0, %s199
      %s202 = sphi 0, %s201
      %s216 = sphi 0, %s202
      %s220 = sphi 0, %s220
      %s222 = sphi 0, %s220
      %s223 = sphi 0, %s222
      %s237 = sphi 0, %s223
      %s241 = sphi 0, %s241
      %s243 = sphi 0, %s241
      %s244 = sphi 0, %s243
      %s258 = sphi 0, %s244
      %s264 = sphi 0, %s266
      %s267 = sphi 0, %s264
      %s268 = sphi 0, %s267
      %s284 = sphi 0, %s268
    $region4: #{tpu_custom_call.1} parent=1 // loop_header_branch
      %22 = sbr.rel (%p20) target = $region8
    $region5: #{tpu_custom_call.1} parent=1 // loop_body
      %s24 = ssub.s32 %s19, 1
      %s25 = ssub.s32 %s19, 2
      %s26 = sadd.s32 %s19, 1
      %s27 = ssub.s32 %s19, %s26
      %p28 = scmp.eq.s32.totalorder %s27, 0
      %s30 = sadd.s32 %s29, 1
      %s31 = scalar_select %p28, %s29, %s30
      %p34 = pneg %p28
      %p35 = scmp.eq.s32.totalorder %s19, 1
      %p36 = por %p34, %p35
      %p37 = scmp.ne.s32.totalorder %s29, %s32
      %p38 = scmp.eq.s32.totalorder %s19, 0
      %p39 = por %p37, %p38
      %p40 = scmp.ne.s32.totalorder %s29, %s32
      %p41 = scmp.eq.s32.totalorder %s24, 1
      %p42 = por %p40, %p41
      %p43 = scmp.ne.s32.totalorder %s32, %s33
      %p44 = scmp.eq.s32.totalorder %s24, 0
      %p45 = por %p43, %p44
      %p46 = scmp.ne.s32.totalorder %s32, %s33
      %p47 = scmp.eq.s32.totalorder %s25, 1
      %p48 = por %p46, %p47
      %p50 = scmp.ne.s32.totalorder %s33, %s49
      %p51 = scmp.eq.s32.totalorder %s25, 0
      %p52 = por %p50, %p51
      %s53 = ssub.s32 %s19, %s26
      %p54 = scmp.eq.s32.totalorder %s53, 0
      %s56 = sadd.s32 %s55, 1
      %s57 = scalar_select %p54, %s55, %s56
      %p60 = pneg %p54
      %p61 = scmp.eq.s32.totalorder %s19, 1
      %p62 = por %p60, %p61
      %p63 = scmp.ne.s32.totalorder %s55, %s58
      %p64 = scmp.eq.s32.totalorder %s19, 0
      %p65 = por %p63, %p64
      %p66 = scmp.ne.s32.totalorder %s55, %s58
      %p67 = scmp.eq.s32.totalorder %s24, 1
      %p68 = por %p66, %p67
      %p69 = scmp.ne.s32.totalorder %s58, %s59
      %p70 = scmp.eq.s32.totalorder %s24, 0
      %p71 = por %p69, %p70
      %p72 = scmp.ne.s32.totalorder %s58, %s59
      %p73 = scmp.eq.s32.totalorder %s25, 1
      %p74 = por %p72, %p73
      %p76 = scmp.ne.s32.totalorder %s59, %s75
      %p77 = scmp.eq.s32.totalorder %s25, 0
      %p78 = por %p76, %p77
      %s79 = ssub.s32 %s19, %s26
      %p80 = scmp.eq.s32.totalorder %s79, 0
      %s82 = sadd.s32 %s81, 1
      %s83 = scalar_select %p80, %s81, %s82
      %p86 = pneg %p80
      %p87 = scmp.eq.s32.totalorder %s19, 1
      %p88 = por %p86, %p87
      %p89 = scmp.ne.s32.totalorder %s81, %s84
      %p90 = scmp.eq.s32.totalorder %s19, 0
      %p91 = por %p89, %p90
      %p92 = scmp.ne.s32.totalorder %s81, %s84
      %p93 = scmp.eq.s32.totalorder %s24, 1
      %p94 = por %p92, %p93
      %p95 = scmp.ne.s32.totalorder %s84, %s85
      %p96 = scmp.eq.s32.totalorder %s24, 0
      %p97 = por %p95, %p96
      %p98 = scmp.ne.s32.totalorder %s84, %s85
      %p99 = scmp.eq.s32.totalorder %s25, 1
      %p100 = por %p98, %p99
      %p102 = scmp.ne.s32.totalorder %s85, %s101
      %p103 = scmp.eq.s32.totalorder %s25, 0
      %p104 = por %p102, %p103
      %s105 = ssub.s32 %s19, %s26
      %p106 = scmp.eq.s32.totalorder %s105, 0
      %s108 = sadd.s32 %s107, 1
      %s109 = scalar_select %p106, %s107, %s108
      %p112 = pneg %p106
      %p113 = scmp.eq.s32.totalorder %s19, 1
      %p114 = por %p112, %p113
      %p115 = scmp.ne.s32.totalorder %s107, %s110
      %p116 = scmp.eq.s32.totalorder %s19, 0
      %p117 = por %p115, %p116
      %p118 = scmp.ne.s32.totalorder %s107, %s110
      %p119 = scmp.eq.s32.totalorder %s24, 1
      %p120 = por %p118, %p119
      %p121 = scmp.ne.s32.totalorder %s110, %s111
      %p122 = scmp.eq.s32.totalorder %s24, 0
      %p123 = por %p121, %p122
      %p124 = scmp.ne.s32.totalorder %s110, %s111
      %p125 = scmp.eq.s32.totalorder %s25, 1
      %p126 = por %p124, %p125
      %p128 = scmp.ne.s32.totalorder %s111, %s127
      %p129 = scmp.eq.s32.totalorder %s25, 0
      %p130 = por %p128, %p129
      %s131 = ssub.s32 %s19, %s26
      %p132 = scmp.eq.s32.totalorder %s131, 0
      %s134 = sadd.s32 %s133, 1
      %s135 = scalar_select %p132, %s133, %s134
      %p138 = pneg %p132
      %p139 = scmp.eq.s32.totalorder %s19, 1
      %p140 = por %p138, %p139
      %p141 = scmp.ne.s32.totalorder %s133, %s136
      %p142 = scmp.eq.s32.totalorder %s19, 0
      %p143 = por %p141, %p142
      %p144 = scmp.ne.s32.totalorder %s133, %s136
      %p145 = scmp.eq.s32.totalorder %s24, 1
      %p146 = por %p144, %p145
      %p147 = scmp.ne.s32.totalorder %s136, %s137
      %p148 = scmp.eq.s32.totalorder %s24, 0
      %p149 = por %p147, %p148
      %p150 = scmp.ne.s32.totalorder %s136, %s137
      %p151 = scmp.eq.s32.totalorder %s25, 1
      %p152 = por %p150, %p151
      %p154 = scmp.ne.s32.totalorder %s137, %s153
      %p155 = scmp.eq.s32.totalorder %s25, 0
      %p156 = por %p154, %p155
      %s158 = sadd.s32 %s157, 1
      %p161 = scmp.eq.s32.totalorder %s19, 1
      %p162 = scmp.ne.s32.totalorder %s157, %s159
      %p163 = scmp.eq.s32.totalorder %s19, 0
      %p164 = por %p162, %p163
      %p165 = scmp.ne.s32.totalorder %s157, %s159
      %p166 = scmp.eq.s32.totalorder %s24, 1
      %p167 = por %p165, %p166
      %p168 = scmp.ne.s32.totalorder %s159, %s160
      %p169 = scmp.eq.s32.totalorder %s24, 0
      %p170 = por %p168, %p169
      %p171 = scmp.ne.s32.totalorder %s159, %s160
      %p172 = scmp.eq.s32.totalorder %s25, 1
      %p173 = por %p171, %p172
      %p175 = scmp.ne.s32.totalorder %s160, %s174
      %p176 = scmp.eq.s32.totalorder %s25, 0
      %p177 = por %p175, %p176
      %s179 = sadd.s32 %s178, 1
      %p182 = scmp.eq.s32.totalorder %s19, 1
      %p183 = scmp.ne.s32.totalorder %s178, %s180
      %p184 = scmp.eq.s32.totalorder %s19, 0
      %p185 = por %p183, %p184
      %p186 = scmp.ne.s32.totalorder %s178, %s180
      %p187 = scmp.eq.s32.totalorder %s24, 1
      %p188 = por %p186, %p187
      %p189 = scmp.ne.s32.totalorder %s180, %s181
      %p190 = scmp.eq.s32.totalorder %s24, 0
      %p191 = por %p189, %p190
      %p192 = scmp.ne.s32.totalorder %s180, %s181
      %p193 = scmp.eq.s32.totalorder %s25, 1
      %p194 = por %p192, %p193
      %p196 = scmp.ne.s32.totalorder %s181, %s195
      %p197 = scmp.eq.s32.totalorder %s25, 0
      %p198 = por %p196, %p197
      %s200 = sadd.s32 %s199, 1
      %p203 = scmp.eq.s32.totalorder %s19, 1
      %p204 = scmp.ne.s32.totalorder %s199, %s201
      %p205 = scmp.eq.s32.totalorder %s19, 0
      %p206 = por %p204, %p205
      %p207 = scmp.ne.s32.totalorder %s199, %s201
      %p208 = scmp.eq.s32.totalorder %s24, 1
      %p209 = por %p207, %p208
      %p210 = scmp.ne.s32.totalorder %s201, %s202
      %p211 = scmp.eq.s32.totalorder %s24, 0
      %p212 = por %p210, %p211
      %p213 = scmp.ne.s32.totalorder %s201, %s202
      %p214 = scmp.eq.s32.totalorder %s25, 1
      %p215 = por %p213, %p214
      %p217 = scmp.ne.s32.totalorder %s202, %s216
      %p218 = scmp.eq.s32.totalorder %s25, 0
      %p219 = por %p217, %p218
      %s221 = sadd.s32 %s220, 1
      %p224 = scmp.eq.s32.totalorder %s19, 1
      %p225 = scmp.ne.s32.totalorder %s220, %s222
      %p226 = scmp.eq.s32.totalorder %s19, 0
      %p227 = por %p225, %p226
      %p228 = scmp.ne.s32.totalorder %s220, %s222
      %p229 = scmp.eq.s32.totalorder %s24, 1
      %p230 = por %p228, %p229
      %p231 = scmp.ne.s32.totalorder %s222, %s223
      %p232 = scmp.eq.s32.totalorder %s24, 0
      %p233 = por %p231, %p232
      %p234 = scmp.ne.s32.totalorder %s222, %s223
      %p235 = scmp.eq.s32.totalorder %s25, 1
      %p236 = por %p234, %p235
      %p238 = scmp.ne.s32.totalorder %s223, %s237
      %p239 = scmp.eq.s32.totalorder %s25, 0
      %p240 = por %p238, %p239
      %s242 = sadd.s32 %s241, 1
      %p245 = scmp.eq.s32.totalorder %s19, 1
      %p246 = scmp.ne.s32.totalorder %s241, %s243
      %p247 = scmp.eq.s32.totalorder %s19, 0
      %p248 = por %p246, %p247
      %p249 = scmp.ne.s32.totalorder %s241, %s243
      %p250 = scmp.eq.s32.totalorder %s24, 1
      %p251 = por %p249, %p250
      %p252 = scmp.ne.s32.totalorder %s243, %s244
      %p253 = scmp.eq.s32.totalorder %s24, 0
      %p254 = por %p252, %p253
      %p255 = scmp.ne.s32.totalorder %s243, %s244
      %p256 = scmp.eq.s32.totalorder %s25, 1
      %p257 = por %p255, %p256
      %p259 = scmp.ne.s32.totalorder %s244, %s258
      %p260 = scmp.eq.s32.totalorder %s25, 0
      %p261 = por %p259, %p260
      %s262 = ssub.s32 %s19, %s26
      %p263 = scmp.eq.s32.totalorder %s262, 0
      %s265 = sadd.s32 %s264, 1
      %s266 = scalar_select %p263, %s264, %s265
      %p269 = pneg %p263
      %p270 = scmp.eq.s32.totalorder %s19, 1
      %p271 = por %p269, %p270
      %p272 = scmp.ne.s32.totalorder %s264, %s267
      %p273 = scmp.eq.s32.totalorder %s19, 0
      %p274 = por %p272, %p273
      %p275 = scmp.ne.s32.totalorder %s264, %s267
      %p276 = scmp.eq.s32.totalorder %s24, 1
      %p277 = por %p275, %p276
      %p278 = scmp.ne.s32.totalorder %s267, %s268
      %p279 = scmp.eq.s32.totalorder %s24, 0
      %p280 = por %p278, %p279
      %p281 = scmp.ne.s32.totalorder %s267, %s268
      %p282 = scmp.eq.s32.totalorder %s25, 1
      %p283 = por %p281, %p282
      %p285 = scmp.ne.s32.totalorder %s268, %s284
      %p286 = scmp.eq.s32.totalorder %s25, 0
      %p287 = por %p285, %p286
      %p288 = scmp.le.s32.totalorder 1, %s19
      %p289 = scmp.lt.s32.totalorder %s19, 3
      %p290 = pnand %p288, %p289
      %p291 = pneg %p290
      // Predicated region
      $region9: #{tpu_custom_call.1} parent=5 // pred_check
        _
      $region10: #{tpu_custom_call.1} parent=5 // pred_check_branch
        %293 = sbr.rel (%p290) target = $region12
      $region11: #{tpu_custom_call.1} parent=5 // pred_region
        %s294 = ssub.s32 %s19, 1
        // Predicated region
        $region13: #{tpu_custom_call.1} parent=11 // pred_check
          %p295 = pneg %p170
        $region14: #{tpu_custom_call.1} parent=11 // pred_check_branch
          %297 = sbr.rel (%p295) target = $region16
        $region15: #{tpu_custom_call.1} parent=11 // pred_region
          _
        $region16: #{tpu_custom_call.1} parent=11 // pred_fallthru
          _
        // Predicated region
        $region17: #{tpu_custom_call.1} parent=11 // pred_check
          %p298 = pneg %p191
        $region18: #{tpu_custom_call.1} parent=11 // pred_check_branch
          %300 = sbr.rel (%p298) target = $region20
        $region19: #{tpu_custom_call.1} parent=11 // pred_region
          _
        $region20: #{tpu_custom_call.1} parent=11 // pred_fallthru
          _
        // Predicated region
        $region21: #{tpu_custom_call.1} parent=11 // pred_check
          %p301 = pneg %p212
        $region22: #{tpu_custom_call.1} parent=11 // pred_check_branch
          %303 = sbr.rel (%p301) target = $region24
        $region23: #{tpu_custom_call.1} parent=11 // pred_region
          _
        $region24: #{tpu_custom_call.1} parent=11 // pred_fallthru
          _
        // Predicated region
        $region25: #{tpu_custom_call.1} parent=11 // pred_check
          %p304 = pneg %p233
        $region26: #{tpu_custom_call.1} parent=11 // pred_check_branch
          %306 = sbr.rel (%p304) target = $region28
        $region27: #{tpu_custom_call.1} parent=11 // pred_region
          _
        $region28: #{tpu_custom_call.1} parent=11 // pred_fallthru
          _
        // Predicated region
        $region29: #{tpu_custom_call.1} parent=11 // pred_check
          %p307 = pneg %p254
        $region30: #{tpu_custom_call.1} parent=11 // pred_check_branch
          %309 = sbr.rel (%p307) target = $region32
        $region31: #{tpu_custom_call.1} parent=11 // pred_region
          _
        $region32: #{tpu_custom_call.1} parent=11 // pred_fallthru
          _
      $region12: #{tpu_custom_call.1} parent=5 // pred_fallthru
        _
      %p310 = scmp.lt.s32.totalorder %s19, 2
      // Predicated region
      $region33: #{tpu_custom_call.1} parent=5 // pred_check
        %p311 = pneg %p310
      $region34: #{tpu_custom_call.1} parent=5 // pred_check_branch
        %313 = sbr.rel (%p311) target = $region36
      $region35: #{tpu_custom_call.1} parent=5 // pred_region
        // Predicated region
        $region37: #{tpu_custom_call.1} parent=35 // pred_check
          %p314 = pneg %p39
        $region38: #{tpu_custom_call.1} parent=35 // pred_check_branch
          %316 = sbr.rel (%p314) target = $region40
        $region39: #{tpu_custom_call.1} parent=35 // pred_region
          %s317 = smul.u32 2, %s19
          %p318 = scmp.lt.s32.totalorder %s317, 3
          %s319 = scalar_select %p318, %s317, 3
          %s320 = smul.addr %s319, 8
          %s321 = scalar_lea.vmem %s0, %s320
          %s322 = smul.u32 2, %s19
        $region40: #{tpu_custom_call.1} parent=35 // pred_fallthru
          _
        // Predicated region
        $region41: #{tpu_custom_call.1} parent=35 // pred_check
          %p323 = pneg %p65
        $region42: #{tpu_custom_call.1} parent=35 // pred_check_branch
          %325 = sbr.rel (%p323) target = $region44
        $region43: #{tpu_custom_call.1} parent=35 // pred_region
          %s326 = smul.u32 2, %s19
          %p327 = scmp.lt.s32.totalorder %s326, 3
          %s328 = scalar_select %p327, %s326, 3
          %s329 = smul.addr %s328, 4
          %s330 = scalar_lea.vmem %s1, %s329
          %s331 = smul.u32 2, %s19
        $region44: #{tpu_custom_call.1} parent=35 // pred_fallthru
          _
        // Predicated region
        $region45: #{tpu_custom_call.1} parent=35 // pred_check
          %p332 = pneg %p91
        $region46: #{tpu_custom_call.1} parent=35 // pred_check_branch
          %334 = sbr.rel (%p332) target = $region48
        $region47: #{tpu_custom_call.1} parent=35 // pred_region
          %s335 = smul.u32 2, %s19
          %p336 = scmp.lt.s32.totalorder %s335, 3
          %s337 = scalar_select %p336, %s335, 3
          %s338 = scalar_lea.vmem %s2, %s337
          %s339 = smul.u32 2, %s19
        $region48: #{tpu_custom_call.1} parent=35 // pred_fallthru
          _
        // Predicated region
        $region49: #{tpu_custom_call.1} parent=35 // pred_check
          %p340 = pneg %p117
        $region50: #{tpu_custom_call.1} parent=35 // pred_check_branch
          %342 = sbr.rel (%p340) target = $region52
        $region51: #{tpu_custom_call.1} parent=35 // pred_region
          %s343 = smul.u32 2, %s19
          %p344 = scmp.lt.s32.totalorder %s343, 3
          %s345 = scalar_select %p344, %s343, 3
          %s346 = scalar_lea.vmem %s3, %s345
          %s347 = smul.u32 2, %s19
        $region52: #{tpu_custom_call.1} parent=35 // pred_fallthru
          _
        // Predicated region
        $region53: #{tpu_custom_call.1} parent=35 // pred_check
          %p348 = pneg %p143
        $region54: #{tpu_custom_call.1} parent=35 // pred_check_branch
          %350 = sbr.rel (%p348) target = $region56
        $region55: #{tpu_custom_call.1} parent=35 // pred_region
          %s351 = smul.u32 2, %s19
          %p352 = scmp.lt.s32.totalorder %s351, 3
          %s353 = scalar_select %p352, %s351, 3
          %s354 = scalar_lea.vmem %s4, %s353
          %s355 = smul.u32 2, %s19
        $region56: #{tpu_custom_call.1} parent=35 // pred_fallthru
          _
      $region36: #{tpu_custom_call.1} parent=5 // pred_fallthru
        _
      %p356 = scmp.le.s32.totalorder 1, %s19
      %p357 = scmp.lt.s32.totalorder %s19, 3
      %p358 = pnand %p356, %p357
      %p359 = pneg %p358
      // Predicated region
      $region57: #{tpu_custom_call.1} parent=5 // pred_check
        _
      $region58: #{tpu_custom_call.1} parent=5 // pred_check_branch
        %361 = sbr.rel (%p358) target = $region60
      $region59: #{tpu_custom_call.1} parent=5 // pred_region
        %s362 = ssub.s32 %s19, 1
        %s363 = smul.u32 2, %s24
        %p364 = scmp.lt.s32.totalorder %s363, 3
        %s365 = scalar_select %p364, %s363, 3
        %s366 = smul.addr %s365, 8
        %s367 = scalar_lea.vmem %s0, %s366
        %p368 = pneg %p45
        %p369 = pneg %p42
        %s370 = smul.u32 2, %s24
        %p371 = scmp.lt.s32.totalorder %s370, 3
        %s372 = scalar_select %p371, %s370, 3
        %s373 = smul.addr %s372, 4
        %s374 = scalar_lea.vmem %s1, %s373
        %p375 = pneg %p71
        %p376 = pneg %p68
        %s377 = smul.u32 2, %s24
        %p378 = scmp.lt.s32.totalorder %s377, 3
        %s379 = scalar_select %p378, %s377, 3
        %s380 = scalar_lea.vmem %s2, %s379
        %p381 = pneg %p97
        %p382 = pneg %p94
        %s383 = smul.u32 2, %s24
        %p384 = scmp.lt.s32.totalorder %s383, 3
        %s385 = scalar_select %p384, %s383, 3
        %s386 = scalar_lea.vmem %s3, %s385
        %p387 = pneg %p123
        %p388 = pneg %p120
        %s389 = smul.u32 2, %s24
        %p390 = scmp.lt.s32.totalorder %s389, 3
        %s391 = scalar_select %p390, %s389, 3
        %s392 = scalar_lea.vmem %s4, %s391
        %p393 = pneg %p149
        %p394 = pneg %p146
        %p395 = pneg %p170
        %p396 = pneg %p167
        %p397 = pneg %p191
        %p398 = pneg %p188
        %p399 = pneg %p212
        %p400 = pneg %p209
        %p401 = pneg %p233
        %p402 = pneg %p230
        %p403 = pneg %p254
        %p404 = pneg %p251
        %p405 = pneg %p280
        %p406 = pneg %p277
        %s407 = sand.u32 %s267, 1
        %s408 = scalar_lea.sflag [#allocation3], %s407
        %s409 = sand.u32 %s267, 1
        %s410 = smul.addr %s409, 16
        %s411 = scalar_lea.vmem [#allocation2], %s410
        %s412 = smul.u32 2, %s24
        %p413 = scmp.lt.s32.totalorder %s412, 3
        %s414 = scalar_select %p413, %s412, 3
        %s415 = smul.addr %s414, 8
        %s416 = scalar_lea.vmem %s0, %s415
        %s417 = smul.u32 2, %s24
        %s418 = smul.u32 2, %s24
        %p419 = scmp.lt.s32.totalorder %s418, 3
        %s420 = scalar_select %p419, %s418, 3
        %s421 = smul.addr %s420, 4
        %s422 = scalar_lea.vmem %s1, %s421
        %s423 = smul.u32 2, %s24
        %s424 = smul.u32 2, %s24
        %p425 = scmp.lt.s32.totalorder %s424, 3
        %s426 = scalar_select %p425, %s424, 3
        %s427 = scalar_lea.vmem %s2, %s426
        %s428 = smul.u32 2, %s24
        %s429 = smul.u32 2, %s24
        %p430 = scmp.lt.s32.totalorder %s429, 3
        %s431 = scalar_select %p430, %s429, 3
        %s432 = scalar_lea.vmem %s3, %s431
        %s433 = smul.u32 2, %s24
        %s434 = smul.u32 2, %s24
        %p435 = scmp.lt.s32.totalorder %s434, 3
        %s436 = scalar_select %p435, %s434, 3
        %s437 = scalar_lea.vmem %s4, %s436
        %s438 = smul.u32 2, %s24
        %s439 = smul.u32 2, %s24
        %v441 = vld [vmem:[%s432] sm:$0x1]
        %v442 = vld [vmem:[%s432 + $0x1] sm:$0x1]
        %v443 = vld [vmem:[%s437] sm:$0x1]
        %v444 = vld [vmem:[%s437 + $0x1] sm:$0x1]
        %v445 = vld [vmem:[%s5] sm:$0xf]
        %v446 = vld [vmem:[%s5 + $0x4] sm:$0xf]
        %v447 = vld [vmem:[%s5 + $0x8] sm:$0xf]
        %v448 = vld [vmem:[%s5 + $0xc] sm:$0xf]
        %v449 = vld [vmem:[%s6] sm:$0xf]
        %v450 = vld [vmem:[%s6 + $0x4] sm:$0xf]
        %v451 = vld [vmem:[%s6 + $0x8] sm:$0xf]
        %v452 = vld [vmem:[%s6 + $0xc] sm:$0xf]
        %v456 = vunpack.c.l.s4 1966171168
        %v457 = vunpack.c.0.s8 %v456
        %v458 = vlaneseq
        %v459 = vshrl.u32 %v458, 7
        %v460 = vsub.s32 %v457, %v459
        %v461 = vrot.slane %v443, %v460
        %v463 = vunpack.c.l.s4 1966171168
        %v464 = vunpack.c.0.s8 %v463
        %v465 = vlaneseq
        %v466 = vshrl.u32 %v465, 7
        %v467 = vsub.s32 %v464, %v466
        %v468 = vrot.slane %v461, %v467
        %v470 = vunpack.c.l.s4 1966171168
        %v471 = vunpack.c.0.s8 %v470
        %v472 = vlaneseq
        %v473 = vshrl.u32 %v472, 7
        %v474 = vsub.s32 %v471, %v473
        %v475 = vrot.slane %v444, %v474
        %v477 = vunpack.c.l.s4 1966171168
        %v478 = vunpack.c.0.s8 %v477
        %v479 = vlaneseq
        %v480 = vshrl.u32 %v479, 7
        %v481 = vsub.s32 %v478, %v480
        %v482 = vrot.slane %v475, %v481
        %v483 = vunpack.c.l.b16 %v468
        %v484 = vunpack.c.l.b16 %v482
        %v485 = vrot.slane %v484, 7
        %vm486 = vcmask 1041409
        %v487 = vsel %vm486, %v485, %v483
        %v488 = vpack.c.b16 %v487, %v487
        %v494 = vunpack.c.l.b16 %v449
        %v495 = vunpack.c.l.b16 %v450
        %v496 = vunpack.c.l.b16 %v451
        %v497 = vunpack.c.l.b16 %v452
        %v498 = vpack.c.b16 %v495, %v494
        %v499 = vpack.c.b16 %v497, %v496
        %502 = vmatprep.subr.bf16.mxu0 0
        %503 = vmatpush1.bf16.xpose.msra.mxu0 0
        %504 = vmatprep.subr.bf16.mxu0 0
        %505 = vmatpush1.bf16.xpose.msra.mxu0 0
        %506 = vmatprep.subr.bf16.mxu0 0
        %507 = vmatpush1.bf16.xpose.msra.mxu0 0
        %508 = vmatprep.subr.bf16.mxu0 0
        %509 = vmatpush1.bf16.xpose.msra.mxu0 0
        %510 = vmatprep.subr.bf16.mxu0 0
        %511 = vmatpush1.bf16.xpose.msra.mxu0 0
        %512 = vmatprep.subr.bf16.mxu0 0
        %513 = vmatpush1.bf16.xpose.msra.mxu0 0
        %514 = vmatprep.subr.bf16.mxu0 0
        %515 = vmatpush1.bf16.xpose.msra.mxu0 %v499
        %516 = vmatprep.subr.bf16.mxu0 0
        %517 = vmatpush1.bf16.xpose.msra.mxu0 %v498
        %518 = vmatprep.subr.bf16.mxu0 0
        %519 = vmatpush2.bf16.xpose.msra.mxu0 0
        %520 = vmatprep.subr.bf16.mxu0 0
        %521 = vmatpush2.bf16.xpose.msra.mxu0 0
        %522 = vmatprep.subr.bf16.mxu0 0
        %523 = vmatpush2.bf16.xpose.msra.mxu0 0
        %524 = vmatprep.subr.bf16.mxu0 0
        %525 = vmatpush2.bf16.xpose.msra.mxu0 0
        %526 = vmatprep.subr.bf16.mxu0 0
        %527 = vmatpush2.bf16.xpose.msra.mxu0 0
        %528 = vmatprep.subr.bf16.mxu0 0
        %529 = vmatpush2.bf16.xpose.msra.mxu0 0
        %530 = vmatprep.subr.bf16.mxu0 0
        %531 = vmatpush2.bf16.xpose.msra.mxu0 0
        %532 = vmatprep.subr.bf16.mxu0 0
        %533 = vmatpush2.bf16.xpose.msra.mxu0 0
        %534 = vmatprep.mubr.bf16.mxu0 0
        %535 = vmatmul.mubr.bf16.gmra.mxu0 %v488
        %v536 = vpop.f32.mrf.mxu0
        %v537 = vadd.f32 0.0, %v536
        %v538 = vpop.f32.mrf.mxu0
        %v539 = vpop.f32.mrf.mxu0
        %v540 = vpop.f32.mrf.mxu0
        %541 = vdwg.mxu0
        %v545 = vunpack.c.l.s4 1966171168
        %v546 = vunpack.c.0.s8 %v545
        %v547 = vlaneseq
        %v548 = vshrl.u32 %v547, 7
        %v549 = vsub.s32 %v546, %v548
        %v550 = vrot.slane %v441, %v549
        %v552 = vunpack.c.l.s4 1966171168
        %v553 = vunpack.c.0.s8 %v552
        %v554 = vlaneseq
        %v555 = vshrl.u32 %v554, 7
        %v556 = vsub.s32 %v553, %v555
        %v557 = vrot.slane %v550, %v556
        %v559 = vunpack.c.l.s4 1966171168
        %v560 = vunpack.c.0.s8 %v559
        %v561 = vlaneseq
        %v562 = vshrl.u32 %v561, 7
        %v563 = vsub.s32 %v560, %v562
        %v564 = vrot.slane %v442, %v563
        %v566 = vunpack.c.l.s4 1966171168
        %v567 = vunpack.c.0.s8 %v566
        %v568 = vlaneseq
        %v569 = vshrl.u32 %v568, 7
        %v570 = vsub.s32 %v567, %v569
        %v571 = vrot.slane %v564, %v570
        %v572 = vunpack.c.l.b16 %v557
        %v573 = vunpack.c.l.b16 %v571
        %v574 = vrot.slane %v573, 7
        %v575 = vsel %vm486, %v574, %v572
        %v576 = vpack.c.b16 %v575, %v575
        %v582 = vunpack.c.l.b16 %v445
        %v583 = vunpack.c.l.b16 %v446
        %v584 = vunpack.c.l.b16 %v447
        %v585 = vunpack.c.l.b16 %v448
        %v586 = vpack.c.b16 %v583, %v582
        %v587 = vpack.c.b16 %v585, %v584
        %590 = vmatprep.subr.bf16.mxu0 0
        %591 = vmatpush1.bf16.xpose.msra.mxu0 0
        %592 = vmatprep.subr.bf16.mxu0 0
        %593 = vmatpush1.bf16.xpose.msra.mxu0 0
        %594 = vmatprep.subr.bf16.mxu0 0
        %595 = vmatpush1.bf16.xpose.msra.mxu0 0
        %596 = vmatprep.subr.bf16.mxu0 0
        %597 = vmatpush1.bf16.xpose.msra.mxu0 0
        %598 = vmatprep.subr.bf16.mxu0 0
        %599 = vmatpush1.bf16.xpose.msra.mxu0 0
        %600 = vmatprep.subr.bf16.mxu0 0
        %601 = vmatpush1.bf16.xpose.msra.mxu0 0
        %602 = vmatprep.subr.bf16.mxu0 0
        %603 = vmatpush1.bf16.xpose.msra.mxu0 %v587
        %604 = vmatprep.subr.bf16.mxu0 0
        %605 = vmatpush1.bf16.xpose.msra.mxu0 %v586
        %606 = vmatprep.subr.bf16.mxu0 0
        %607 = vmatpush2.bf16.xpose.msra.mxu0 0
        %608 = vmatprep.subr.bf16.mxu0 0
        %609 = vmatpush2.bf16.xpose.msra.mxu0 0
        %610 = vmatprep.subr.bf16.mxu0 0
        %611 = vmatpush2.bf16.xpose.msra.mxu0 0
        %612 = vmatprep.subr.bf16.mxu0 0
        %613 = vmatpush2.bf16.xpose.msra.mxu0 0
        %614 = vmatprep.subr.bf16.mxu0 0
        %615 = vmatpush2.bf16.xpose.msra.mxu0 0
        %616 = vmatprep.subr.bf16.mxu0 0
        %617 = vmatpush2.bf16.xpose.msra.mxu0 0
        %618 = vmatprep.subr.bf16.mxu0 0
        %619 = vmatpush2.bf16.xpose.msra.mxu0 0
        %620 = vmatprep.subr.bf16.mxu0 0
        %621 = vmatpush2.bf16.xpose.msra.mxu0 0
        %622 = vmatprep.mubr.bf16.mxu0 0
        %623 = vmatmul.mubr.bf16.gmra.mxu0 %v576
        %v624 = vpop.f32.mrf.mxu0
        %v625 = vadd.f32 %v537, %v624
        %v626 = vpop.f32.mrf.mxu0
        %v627 = vpop.f32.mrf.mxu0
        %v628 = vpop.f32.mrf.mxu0
        %629 = vdwg.mxu0
        %v632 = vunpack.c.l.s4 1966171168
        %v633 = vunpack.c.0.s8 %v632
        %v634 = vlaneseq
        %v635 = vshrl.u32 %v634, 7
        %v636 = vsub.s32 %v633, %v635
        %v637 = vrot.slane %v625, %v636
        %v638 = vcombine.high %v637, %v637
        %v640 = vunpack.c.l.s4 1966171168
        %v641 = vunpack.c.0.s8 %v640
        %v642 = vlaneseq
        %v643 = vshrl.u32 %v642, 7
        %v644 = vsub.s32 %v641, %v643
        %v645 = vrot.slane %v637, %v644
        %v647 = vunpack.c.l.s4 1966171168
        %v648 = vunpack.c.0.s8 %v647
        %v649 = vlaneseq
        %v650 = vshrl.u32 %v649, 7
        %v651 = vsub.s32 %v648, %v650
        %v652 = vrot.slane %v638, %v651
        %v653 = vld [vmem:[%s416] sm:$0xff]
        %v654 = vld [vmem:[%s416 + $0x8] sm:$0xff]
        %v655 = vlaneseq
        %v656 = vshrl.u32 %v655, 7
        %v657 = vsub.s32 0, %v656
        %v658 = vrot.slane %v645, %v657
        %v659 = vlaneseq
        %v660 = vshrl.u32 %v659, 7
        %v661 = vsub.s32 0, %v660
        %v662 = vrot.slane %v652, %v661
        %v665 = vadd.f32 %v653, %v658
        %v666 = vadd.f32 %v654, %v662
        %v667 = vtanh.pop %v665
        %v668 = vtanh.pop %v666
        %v669 = vpack.c.bf16 %v667, %v667
        %v670 = vpack.c.bf16 %v668, %v668
        %v671 = vld [vmem:[%s422] sm:$0xf]
        %v672 = vld [vmem:[%s422 + $0x4] sm:$0xf]
        %v673 = vld [vmem:[%s7] sm:$0xf]
        %v674 = vld [vmem:[%s7 + $0x4] sm:$0xf]
        %v675 = vld [vmem:[%s7 + $0x8] sm:$0xf]
        %v676 = vld [vmem:[%s7 + $0xc] sm:$0xf]
        %v679 = vunpack.c.l.b16 %v671
        %v680 = vunpack.c.l.b16 %v672
        %v681 = vpack.c.b16 %v680, %v679
        %v686 = vunpack.c.l.b16 %v673
        %v687 = vunpack.c.l.b16 %v674
        %v688 = vunpack.c.l.b16 %v675
        %v689 = vunpack.c.l.b16 %v676
        %v690 = vpack.c.b16 %v687, %v686
        %v691 = vpack.c.b16 %v689, %v688
        %vm692 = vcmask 523264
        %v694 = vsel %vm692, %v681, 0
        %v697 = vsel %vm692, %v690, 0
        %v700 = vsel %vm692, %v691, 0
        %702 = vmatprep.subr.bf16.mxu0 0
        %703 = vmatpush1.bf16.xpose.msra.mxu0 0
        %704 = vmatprep.subr.bf16.mxu0 0
        %705 = vmatpush1.bf16.xpose.msra.mxu0 0
        %706 = vmatprep.subr.bf16.mxu0 0
        %707 = vmatpush1.bf16.xpose.msra.mxu0 0
        %708 = vmatprep.subr.bf16.mxu0 0
        %709 = vmatpush1.bf16.xpose.msra.mxu0 0
        %710 = vmatprep.subr.bf16.mxu0 0
        %711 = vmatpush1.bf16.xpose.msra.mxu0 0
        %712 = vmatprep.subr.bf16.mxu0 0
        %713 = vmatpush1.bf16.xpose.msra.mxu0 0
        %714 = vmatprep.subr.bf16.mxu0 0
        %715 = vmatpush1.bf16.xpose.msra.mxu0 %v700
        %716 = vmatprep.subr.bf16.mxu0 0
        %717 = vmatpush1.bf16.xpose.msra.mxu0 %v697
        %718 = vmatprep.subr.bf16.mxu0 0
        %719 = vmatpush2.bf16.xpose.msra.mxu0 0
        %720 = vmatprep.subr.bf16.mxu0 0
        %721 = vmatpush2.bf16.xpose.msra.mxu0 0
        %722 = vmatprep.subr.bf16.mxu0 0
        %723 = vmatpush2.bf16.xpose.msra.mxu0 0
        %724 = vmatprep.subr.bf16.mxu0 0
        %725 = vmatpush2.bf16.xpose.msra.mxu0 0
        %726 = vmatprep.subr.bf16.mxu0 0
        %727 = vmatpush2.bf16.xpose.msra.mxu0 0
        %728 = vmatprep.subr.bf16.mxu0 0
        %729 = vmatpush2.bf16.xpose.msra.mxu0 0
        %730 = vmatprep.subr.bf16.mxu0 0
        %731 = vmatpush2.bf16.xpose.msra.mxu0 0
        %732 = vmatprep.subr.bf16.mxu0 0
        %733 = vmatpush2.bf16.xpose.msra.mxu0 0
        %734 = vmatprep.mubr.bf16.mxu0 0
        %735 = vmatmul.mubr.bf16.gmra.mxu0 %v694
        %v736 = vpop.f32.mrf.mxu0
        %v737 = vadd.f32 0.0, %v736
        %v738 = vpop.f32.mrf.mxu0
        %v739 = vpop.f32.mrf.mxu0
        %v740 = vadd.f32 0.0, %v739
        %v741 = vpop.f32.mrf.mxu0
        %742 = vdwg.mxu0
        %v743 = vpack.c.bf16 %v737, %v737
        %v744 = vpack.c.bf16 %v740, %v740
        %v745 = vld [vmem:[%s427] sm:$0x1]
        %v746 = vld [vmem:[%s427 + $0x1] sm:$0x1]
        %v749 = vlaneseq
        %v750 = vshrl.u32 %v749, 7
        %v751 = vsub.s32 0, %v750
        %v752 = vrot.slane %v745, %v751
        %v753 = vlaneseq
        %v754 = vshrl.u32 %v753, 7
        %v755 = vsub.s32 0, %v754
        %v756 = vrot.slane %v746, %v755
        %vm759 = vcmask 261120
        %v761 = vsel %vm759, %v669, 0
        %v764 = vsel %vm759, %v743, 0
        %766 = vmatprep.subr.bf16.mxu0 0
        %767 = vmatpush1.bf16.xpose.msra.mxu0 0
        %768 = vmatprep.subr.bf16.mxu0 0
        %769 = vmatpush1.bf16.xpose.msra.mxu0 0
        %770 = vmatprep.subr.bf16.mxu0 0
        %771 = vmatpush1.bf16.xpose.msra.mxu0 0
        %772 = vmatprep.subr.bf16.mxu0 0
        %773 = vmatpush1.bf16.xpose.msra.mxu0 0
        %774 = vmatprep.subr.bf16.mxu0 0
        %775 = vmatpush1.bf16.xpose.msra.mxu0 0
        %776 = vmatprep.subr.bf16.mxu0 0
        %777 = vmatpush1.bf16.xpose.msra.mxu0 0
        %778 = vmatprep.subr.bf16.mxu0 0
        %779 = vmatpush1.bf16.xpose.msra.mxu0 0
        %780 = vmatprep.subr.bf16.mxu0 0
        %781 = vmatpush1.bf16.xpose.msra.mxu0 %v764
        %782 = vmatprep.subr.bf16.mxu0 0
        %783 = vmatpush2.bf16.xpose.msra.mxu0 0
        %784 = vmatprep.subr.bf16.mxu0 0
        %785 = vmatpush2.bf16.xpose.msra.mxu0 0
        %786 = vmatprep.subr.bf16.mxu0 0
        %787 = vmatpush2.bf16.xpose.msra.mxu0 0
        %788 = vmatprep.subr.bf16.mxu0 0
        %789 = vmatpush2.bf16.xpose.msra.mxu0 0
        %790 = vmatprep.subr.bf16.mxu0 0
        %791 = vmatpush2.bf16.xpose.msra.mxu0 0
        %792 = vmatprep.subr.bf16.mxu0 0
        %793 = vmatpush2.bf16.xpose.msra.mxu0 0
        %794 = vmatprep.subr.bf16.mxu0 0
        %795 = vmatpush2.bf16.xpose.msra.mxu0 0
        %796 = vmatprep.subr.bf16.mxu0 0
        %797 = vmatpush2.bf16.xpose.msra.mxu0 0
        %798 = vmatprep.mubr.bf16.mxu0 0
        %799 = vmatmul.mubr.bf16.gmra.mxu0 %v761
        %v800 = vpop.f32.mrf.mxu0
        %v801 = vadd.f32 %v752, %v800
        %v802 = vpop.f32.mrf.mxu0
        %v803 = vpop.f32.mrf.mxu0
        %v804 = vpop.f32.mrf.mxu0
        %805 = vdwg.mxu0
        %v807 = vsel %vm759, %v670, 0
        %v810 = vsel %vm759, %v744, 0
        %812 = vmatprep.subr.bf16.mxu0 0
        %813 = vmatpush1.bf16.xpose.msra.mxu0 0
        %814 = vmatprep.subr.bf16.mxu0 0
        %815 = vmatpush1.bf16.xpose.msra.mxu0 0
        %816 = vmatprep.subr.bf16.mxu0 0
        %817 = vmatpush1.bf16.xpose.msra.mxu0 0
        %818 = vmatprep.subr.bf16.mxu0 0
        %819 = vmatpush1.bf16.xpose.msra.mxu0 0
        %820 = vmatprep.subr.bf16.mxu0 0
        %821 = vmatpush1.bf16.xpose.msra.mxu0 0
        %822 = vmatprep.subr.bf16.mxu0 0
        %823 = vmatpush1.bf16.xpose.msra.mxu0 0
        %824 = vmatprep.subr.bf16.mxu0 0
        %825 = vmatpush1.bf16.xpose.msra.mxu0 0
        %826 = vmatprep.subr.bf16.mxu0 0
        %827 = vmatpush1.bf16.xpose.msra.mxu0 %v810
        %828 = vmatprep.subr.bf16.mxu0 0
        %829 = vmatpush2.bf16.xpose.msra.mxu0 0
        %830 = vmatprep.subr.bf16.mxu0 0
        %831 = vmatpush2.bf16.xpose.msra.mxu0 0
        %832 = vmatprep.subr.bf16.mxu0 0
        %833 = vmatpush2.bf16.xpose.msra.mxu0 0
        %834 = vmatprep.subr.bf16.mxu0 0
        %835 = vmatpush2.bf16.xpose.msra.mxu0 0
        %836 = vmatprep.subr.bf16.mxu0 0
        %837 = vmatpush2.bf16.xpose.msra.mxu0 0
        %838 = vmatprep.subr.bf16.mxu0 0
        %839 = vmatpush2.bf16.xpose.msra.mxu0 0
        %840 = vmatprep.subr.bf16.mxu0 0
        %841 = vmatpush2.bf16.xpose.msra.mxu0 0
        %842 = vmatprep.subr.bf16.mxu0 0
        %843 = vmatpush2.bf16.xpose.msra.mxu0 0
        %844 = vmatprep.mubr.bf16.mxu0 0
        %845 = vmatmul.mubr.bf16.gmra.mxu0 %v807
        %v846 = vpop.f32.mrf.mxu0
        %v847 = vadd.f32 %v756, %v846
        %v848 = vpop.f32.mrf.mxu0
        %v849 = vpop.f32.mrf.mxu0
        %v850 = vpop.f32.mrf.mxu0
        %851 = vdwg.mxu0
        %vm852 = vcmask 64512
        %v853 = vsel %vm852, %v801, -inf
        %854 = vmax.xlane.f32.xlu0 %v853
        %v855 = vpop.xlane.xlu0 %854
        %v856 = vsel %vm852, %v847, -inf
        %857 = vmax.xlane.f32.xlu0 %v856
        %v858 = vpop.xlane.xlu0 %857
        %v859 = vsub.f32 %v801, %v855
        %v860 = vsub.f32 %v847, %v858
        %v861 = vmul.f32 %v859, 1.442695
        %v862 = vpow.pop %v861
        %v863 = vmul.f32 %v860, 1.442695
        %v864 = vpow.pop %v863
        %v865 = vsel %vm852, %v862, 0.0
        %866 = vadd.xlane.f32.xlu0 %v865
        %v867 = vpop.xlane.xlu0 %866
        %v868 = vsel %vm852, %v864, 0.0
        %869 = vadd.xlane.f32.xlu0 %v868
        %v870 = vpop.xlane.xlu0 %869
        %v871 = vrcp.pop %v867
        %v872 = vrcp.pop %v870
        %v873 = vmul.f32 %v862, %v871
        %v874 = vmul.f32 %v864, %v872
        %v875 = vpack.c.bf16 %v873, %v873
        %v876 = vpack.c.bf16 %v874, %v874
        %v878 = vsel %vm852, %v875, 0
        %vm880 = vcmask 1043456
        %v882 = vsel %vm880, %v671, 0
        %884 = vmatprep.subr.bf16.mxu0 0
        %885 = vmatpush1.bf16.msra.mxu0 0
        %886 = vmatprep.subr.bf16.mxu0 0
        %887 = vmatpush1.bf16.msra.mxu0 0
        %888 = vmatprep.subr.bf16.mxu0 0
        %889 = vmatpush1.bf16.msra.mxu0 0
        %890 = vmatprep.subr.bf16.mxu0 0
        %891 = vmatpush1.bf16.msra.mxu0 0
        %892 = vmatprep.subr.bf16.mxu0 0
        %893 = vmatpush1.bf16.msra.mxu0 0
        %894 = vmatprep.subr.bf16.mxu0 0
        %895 = vmatpush1.bf16.msra.mxu0 0
        %896 = vmatprep.subr.bf16.mxu0 0
        %897 = vmatpush1.bf16.msra.mxu0 0
        %898 = vmatprep.subr.bf16.mxu0 0
        %899 = vmatpush1.bf16.msra.mxu0 %v882
        %900 = vmatprep.subr.bf16.mxu0 0
        %901 = vmatpush2.bf16.msra.mxu0 0
        %902 = vmatprep.subr.bf16.mxu0 0
        %903 = vmatpush2.bf16.msra.mxu0 0
        %904 = vmatprep.subr.bf16.mxu0 0
        %905 = vmatpush2.bf16.msra.mxu0 0
        %906 = vmatprep.subr.bf16.mxu0 0
        %907 = vmatpush2.bf16.msra.mxu0 0
        %908 = vmatprep.subr.bf16.mxu0 0
        %909 = vmatpush2.bf16.msra.mxu0 0
        %910 = vmatprep.subr.bf16.mxu0 0
        %911 = vmatpush2.bf16.msra.mxu0 0
        %912 = vmatprep.subr.bf16.mxu0 0
        %913 = vmatpush2.bf16.msra.mxu0 0
        %914 = vmatprep.subr.bf16.mxu0 0
        %915 = vmatpush2.bf16.msra.mxu0 0
        %916 = vmatprep.mubr.bf16.mxu0 0
        %917 = vmatmul.mubr.bf16.gmra.mxu0 %v878
        %v918 = vpop.f32.mrf.mxu0
        %v919 = vadd.f32 0.0, %v918
        %v920 = vpop.f32.mrf.mxu0
        %v921 = vpop.f32.mrf.mxu0
        %v922 = vpop.f32.mrf.mxu0
        %923 = vdwg.mxu0
        %v925 = vsel %vm852, %v876, 0
        %v928 = vsel %vm880, %v672, 0
        %930 = vmatprep.subr.bf16.mxu0 0
        %931 = vmatpush1.bf16.msra.mxu0 0
        %932 = vmatprep.subr.bf16.mxu0 0
        %933 = vmatpush1.bf16.msra.mxu0 0
        %934 = vmatprep.subr.bf16.mxu0 0
        %935 = vmatpush1.bf16.msra.mxu0 0
        %936 = vmatprep.subr.bf16.mxu0 0
        %937 = vmatpush1.bf16.msra.mxu0 0
        %938 = vmatprep.subr.bf16.mxu0 0
        %939 = vmatpush1.bf16.msra.mxu0 0
        %940 = vmatprep.subr.bf16.mxu0 0
        %941 = vmatpush1.bf16.msra.mxu0 0
        %942 = vmatprep.subr.bf16.mxu0 0
        %943 = vmatpush1.bf16.msra.mxu0 0
        %944 = vmatprep.subr.bf16.mxu0 0
        %945 = vmatpush1.bf16.msra.mxu0 %v928
        %946 = vmatprep.subr.bf16.mxu0 0
        %947 = vmatpush2.bf16.msra.mxu0 0
        %948 = vmatprep.subr.bf16.mxu0 0
        %949 = vmatpush2.bf16.msra.mxu0 0
        %950 = vmatprep.subr.bf16.mxu0 0
        %951 = vmatpush2.bf16.msra.mxu0 0
        %952 = vmatprep.subr.bf16.mxu0 0
        %953 = vmatpush2.bf16.msra.mxu0 0
        %954 = vmatprep.subr.bf16.mxu0 0
        %955 = vmatpush2.bf16.msra.mxu0 0
        %956 = vmatprep.subr.bf16.mxu0 0
        %957 = vmatpush2.bf16.msra.mxu0 0
        %958 = vmatprep.subr.bf16.mxu0 0
        %959 = vmatpush2.bf16.msra.mxu0 0
        %960 = vmatprep.subr.bf16.mxu0 0
        %961 = vmatpush2.bf16.msra.mxu0 0
        %962 = vmatprep.mubr.bf16.mxu0 0
        %963 = vmatmul.mubr.bf16.gmra.mxu0 %v925
        %v964 = vpop.f32.mrf.mxu0
        %v965 = vadd.f32 0.0, %v964
        %v966 = vpop.f32.mrf.mxu0
        %v967 = vpop.f32.mrf.mxu0
        %v968 = vpop.f32.mrf.mxu0
        %969 = vdwg.mxu0
        %v970 = vpack.c.bf16 %v919, %v919
        %v971 = vpack.c.bf16 %v965, %v965
        %v972 = vld [vmem:[%s8] sm:$0xf]
        %v973 = vld [vmem:[%s8 + $0x4] sm:$0xf]
        %v974 = vld [vmem:[%s8 + $0x8] sm:$0xf]
        %v975 = vld [vmem:[%s8 + $0xc] sm:$0xf]
        %v976 = vld [vmem:[%s8 + $0x10] sm:$0xf]
        %v977 = vld [vmem:[%s8 + $0x14] sm:$0xf]
        %v978 = vld [vmem:[%s8 + $0x18] sm:$0xf]
        %v979 = vld [vmem:[%s8 + $0x1c] sm:$0xf]
        %v980 = vld [vmem:[%s8 + $0x20] sm:$0xf]
        %v981 = vld [vmem:[%s8 + $0x24] sm:$0xf]
        %v982 = vld [vmem:[%s8 + $0x28] sm:$0xf]
        %v983 = vld [vmem:[%s8 + $0x2c] sm:$0xf]
        %v984 = vld [vmem:[%s8 + $0x30] sm:$0xf]
        %v985 = vld [vmem:[%s8 + $0x34] sm:$0xf]
        %v986 = vld [vmem:[%s8 + $0x38] sm:$0xf]
        %v987 = vld [vmem:[%s8 + $0x3c] sm:$0xf]
        %v988 = vld [vmem:[%s9] sm:$0xf]
        %v989 = vld [vmem:[%s9 + $0x4] sm:$0xf]
        %v990 = vld [vmem:[%s9 + $0x8] sm:$0xf]
        %v991 = vld [vmem:[%s9 + $0xc] sm:$0xf]
        %v992 = vld [vmem:[%s9 + $0x10] sm:$0xf]
        %v993 = vld [vmem:[%s9 + $0x14] sm:$0xf]
        %v994 = vld [vmem:[%s9 + $0x18] sm:$0xf]
        %v995 = vld [vmem:[%s9 + $0x1c] sm:$0xf]
        %v996 = vld [vmem:[%s9 + $0x20] sm:$0xf]
        %v997 = vld [vmem:[%s9 + $0x24] sm:$0xf]
        %v998 = vld [vmem:[%s9 + $0x28] sm:$0xf]
        %v999 = vld [vmem:[%s9 + $0x2c] sm:$0xf]
        %v1000 = vld [vmem:[%s9 + $0x30] sm:$0xf]
        %v1001 = vld [vmem:[%s9 + $0x34] sm:$0xf]
        %v1002 = vld [vmem:[%s9 + $0x38] sm:$0xf]
        %v1003 = vld [vmem:[%s9 + $0x3c] sm:$0xf]
        %v1006 = vunpack.c.l.b16 %v669
        %v1007 = vunpack.c.l.b16 %v670
        %v1008 = vpack.c.b16 %v1007, %v1006
        %v1025 = vunpack.c.l.b16 %v988
        %v1026 = vunpack.c.l.b16 %v989
        %v1027 = vunpack.c.l.b16 %v990
        %v1028 = vunpack.c.l.b16 %v991
        %v1029 = vunpack.c.l.b16 %v992
        %v1030 = vunpack.c.l.b16 %v993
        %v1031 = vunpack.c.l.b16 %v994
        %v1032 = vunpack.c.l.b16 %v995
        %v1033 = vunpack.c.l.b16 %v996
        %v1034 = vunpack.c.l.b16 %v997
        %v1035 = vunpack.c.l.b16 %v998
        %v1036 = vunpack.c.l.b16 %v999
        %v1037 = vunpack.c.l.b16 %v1000
        %v1038 = vunpack.c.l.b16 %v1001
        %v1039 = vunpack.c.l.b16 %v1002
        %v1040 = vunpack.c.l.b16 %v1003
        %v1041 = vpack.c.b16 %v1026, %v1025
        %v1042 = vpack.c.b16 %v1028, %v1027
        %v1043 = vpack.c.b16 %v1030, %v1029
        %v1044 = vpack.c.b16 %v1032, %v1031
        %v1045 = vpack.c.b16 %v1034, %v1033
        %v1046 = vpack.c.b16 %v1036, %v1035
        %v1047 = vpack.c.b16 %v1038, %v1037
        %v1048 = vpack.c.b16 %v1040, %v1039
        %v1050 = vsel %vm759, %v1008, 0
        %v1053 = vsel %vm759, %v1041, 0
        %v1056 = vsel %vm759, %v1042, 0
        %v1059 = vsel %vm759, %v1043, 0
        %v1062 = vsel %vm759, %v1044, 0
        %v1065 = vsel %vm759, %v1045, 0
        %v1068 = vsel %vm759, %v1046, 0
        %v1071 = vsel %vm759, %v1047, 0
        %v1074 = vsel %vm759, %v1048, 0
        %1076 = vmatprep.subr.bf16.mxu0 0
        %1077 = vmatpush1.bf16.xpose.msra.mxu0 %v1074
        %1078 = vmatprep.subr.bf16.mxu0 0
        %1079 = vmatpush1.bf16.xpose.msra.mxu0 %v1071
        %1080 = vmatprep.subr.bf16.mxu0 0
        %1081 = vmatpush1.bf16.xpose.msra.mxu0 %v1068
        %1082 = vmatprep.subr.bf16.mxu0 0
        %1083 = vmatpush1.bf16.xpose.msra.mxu0 %v1065
        %1084 = vmatprep.subr.bf16.mxu0 0
        %1085 = vmatpush1.bf16.xpose.msra.mxu0 %v1062
        %1086 = vmatprep.subr.bf16.mxu0 0
        %1087 = vmatpush1.bf16.xpose.msra.mxu0 %v1059
        %1088 = vmatprep.subr.bf16.mxu0 0
        %1089 = vmatpush1.bf16.xpose.msra.mxu0 %v1056
        %1090 = vmatprep.subr.bf16.mxu0 0
        %1091 = vmatpush1.bf16.xpose.msra.mxu0 %v1053
        %1092 = vmatprep.subr.bf16.mxu0 0
        %1093 = vmatpush2.bf16.xpose.msra.mxu0 0
        %1094 = vmatprep.subr.bf16.mxu0 0
        %1095 = vmatpush2.bf16.xpose.msra.mxu0 0
        %1096 = vmatprep.subr.bf16.mxu0 0
        %1097 = vmatpush2.bf16.xpose.msra.mxu0 0
        %1098 = vmatprep.subr.bf16.mxu0 0
        %1099 = vmatpush2.bf16.xpose.msra.mxu0 0
        %1100 = vmatprep.subr.bf16.mxu0 0
        %1101 = vmatpush2.bf16.xpose.msra.mxu0 0
        %1102 = vmatprep.subr.bf16.mxu0 0
        %1103 = vmatpush2.bf16.xpose.msra.mxu0 0
        %1104 = vmatprep.subr.bf16.mxu0 0
        %1105 = vmatpush2.bf16.xpose.msra.mxu0 0
        %1106 = vmatprep.subr.bf16.mxu0 0
        %1107 = vmatpush2.bf16.xpose.msra.mxu0 0
        %1108 = vmatprep.mubr.bf16.mxu0 0
        %1109 = vmatmul.mubr.bf16.gmra.mxu0 %v1050
        %v1110 = vpop.f32.mrf.mxu0
        %v1111 = vadd.f32 0.0, %v1110
        %v1112 = vpop.f32.mrf.mxu0
        %v1113 = vpop.f32.mrf.mxu0
        %v1114 = vadd.f32 0.0, %v1113
        %v1115 = vpop.f32.mrf.mxu0
        %1116 = vdwg.mxu0
        %v1119 = vunpack.c.l.b16 %v970
        %v1120 = vunpack.c.l.b16 %v971
        %v1121 = vpack.c.b16 %v1120, %v1119
        %v1138 = vunpack.c.l.b16 %v972
        %v1139 = vunpack.c.l.b16 %v973
        %v1140 = vunpack.c.l.b16 %v974
        %v1141 = vunpack.c.l.b16 %v975
        %v1142 = vunpack.c.l.b16 %v976
        %v1143 = vunpack.c.l.b16 %v977
        %v1144 = vunpack.c.l.b16 %v978
        %v1145 = vunpack.c.l.b16 %v979
        %v1146 = vunpack.c.l.b16 %v980
        %v1147 = vunpack.c.l.b16 %v981
        %v1148 = vunpack.c.l.b16 %v982
        %v1149 = vunpack.c.l.b16 %v983
        %v1150 = vunpack.c.l.b16 %v984
        %v1151 = vunpack.c.l.b16 %v985
        %v1152 = vunpack.c.l.b16 %v986
        %v1153 = vunpack.c.l.b16 %v987
        %v1154 = vpack.c.b16 %v1139, %v1138
        %v1155 = vpack.c.b16 %v1141, %v1140
        %v1156 = vpack.c.b16 %v1143, %v1142
        %v1157 = vpack.c.b16 %v1145, %v1144
        %v1158 = vpack.c.b16 %v1147, %v1146
        %v1159 = vpack.c.b16 %v1149, %v1148
        %v1160 = vpack.c.b16 %v1151, %v1150
        %v1161 = vpack.c.b16 %v1153, %v1152
        %v1163 = vsel %vm692, %v1121, 0
        %v1166 = vsel %vm692, %v1154, 0
        %v1169 = vsel %vm692, %v1155, 0
        %v1172 = vsel %vm692, %v1156, 0
        %v1175 = vsel %vm692, %v1157, 0
        %v1178 = vsel %vm692, %v1158, 0
        %v1181 = vsel %vm692, %v1159, 0
        %v1184 = vsel %vm692, %v1160, 0
        %v1187 = vsel %vm692, %v1161, 0
        %1189 = vmatprep.subr.bf16.mxu0 0
        %1190 = vmatpush1.bf16.xpose.msra.mxu0 %v1187
        %1191 = vmatprep.subr.bf16.mxu0 0
        %1192 = vmatpush1.bf16.xpose.msra.mxu0 %v1184
        %1193 = vmatprep.subr.bf16.mxu0 0
        %1194 = vmatpush1.bf16.xpose.msra.mxu0 %v1181
        %1195 = vmatprep.subr.bf16.mxu0 0
        %1196 = vmatpush1.bf16.xpose.msra.mxu0 %v1178
        %1197 = vmatprep.subr.bf16.mxu0 0
        %1198 = vmatpush1.bf16.xpose.msra.mxu0 %v1175
        %1199 = vmatprep.subr.bf16.mxu0 0
        %1200 = vmatpush1.bf16.xpose.msra.mxu0 %v1172
        %1201 = vmatprep.subr.bf16.mxu0 0
        %1202 = vmatpush1.bf16.xpose.msra.mxu0 %v1169
        %1203 = vmatprep.subr.bf16.mxu0 0
        %1204 = vmatpush1.bf16.xpose.msra.mxu0 %v1166
        %1205 = vmatprep.subr.bf16.mxu0 0
        %1206 = vmatpush2.bf16.xpose.msra.mxu0 0
        %1207 = vmatprep.subr.bf16.mxu0 0
        %1208 = vmatpush2.bf16.xpose.msra.mxu0 0
        %1209 = vmatprep.subr.bf16.mxu0 0
        %1210 = vmatpush2.bf16.xpose.msra.mxu0 0
        %1211 = vmatprep.subr.bf16.mxu0 0
        %1212 = vmatpush2.bf16.xpose.msra.mxu0 0
        %1213 = vmatprep.subr.bf16.mxu0 0
        %1214 = vmatpush2.bf16.xpose.msra.mxu0 0
        %1215 = vmatprep.subr.bf16.mxu0 0
        %1216 = vmatpush2.bf16.xpose.msra.mxu0 0
        %1217 = vmatprep.subr.bf16.mxu0 0
        %1218 = vmatpush2.bf16.xpose.msra.mxu0 0
        %1219 = vmatprep.subr.bf16.mxu0 0
        %1220 = vmatpush2.bf16.xpose.msra.mxu0 0
        %1221 = vmatprep.mubr.bf16.mxu0 0
        %1222 = vmatmul.mubr.bf16.gmra.mxu0 %v1163
        %v1223 = vpop.f32.mrf.mxu0
        %v1224 = vadd.f32 %v1111, %v1223
        %v1225 = vpop.f32.mrf.mxu0
        %v1226 = vpop.f32.mrf.mxu0
        %v1227 = vadd.f32 %v1114, %v1226
        %v1228 = vpop.f32.mrf.mxu0
        %1229 = vdwg.mxu0
        %v1230 = vtanh.pop %v1224
        %v1231 = vtanh.pop %v1227
        %1232 = vst [vmem:[%s411] sm:$0xff] %v1230
        %1233 = vst [vmem:[%s411 + $0x8] sm:$0xff] %v1231
        %s1234 = sand.u32 %s267, 1
        %s1235 = scalar_lea.sflag [#allocation3], %s1234
        %s1236 = sand.u32 %s267, 1
        %s1237 = smul.addr %s1236, 16
        %s1238 = scalar_lea.vmem [#allocation2], %s1237
        // Predicated region
        $region61: #{tpu_custom_call.1} parent=59 // pred_check
          %p1239 = pneg %p277
        $region62: #{tpu_custom_call.1} parent=59 // pred_check_branch
          %1241 = sbr.rel (%p1239) target = $region64
        $region63: #{tpu_custom_call.1} parent=59 // pred_region
          %s1242 = smul.u32 2, %s24
          %s1244 = ssub.s32 256, 256
          %1245 = vsyncadd %s1235, %s1244
          %s1246 = smul.addr %s1242, 128
          %s1247 = scalar_lea.hbm %s10, %s1246
          %s1248 = sshll.u32 %s1238, 4
          %s1249 = int_to_ptr.vmem [resolvable:$true] %s1248
          %1254 = dma.vmem_to_hbm [thread:$0]  %s1249, 256, %s1247, %s1235, 128, 128, 8
        $region64: #{tpu_custom_call.1} parent=59 // pred_fallthru
          _
      $region60: #{tpu_custom_call.1} parent=5 // pred_fallthru
        _
      %p1255 = scmp.le.s32.totalorder 2, %s19
      // Predicated region
      $region65: #{tpu_custom_call.1} parent=5 // pred_check
        %p1256 = pneg %p1255
      $region66: #{tpu_custom_call.1} parent=5 // pred_check_branch
        %1258 = sbr.rel (%p1256) target = $region68
      $region67: #{tpu_custom_call.1} parent=5 // pred_region
        %s1259 = ssub.s32 %s19, 2
        // Predicated region
        $region69: #{tpu_custom_call.1} parent=67 // pred_check
          %p1260 = pneg %p283
        $region70: #{tpu_custom_call.1} parent=67 // pred_check_branch
          %1262 = sbr.rel (%p1260) target = $region72
        $region71: #{tpu_custom_call.1} parent=67 // pred_region
          %s1263 = sand.u32 %s268, 1
          %s1264 = scalar_lea.sflag [#allocation3], %s1263
          %s1265 = sand.u32 %s268, 1
          %s1266 = smul.addr %s1265, 16
          %s1267 = scalar_lea.vmem [#allocation2], %s1266
          %1268 = dma.done %s1264, 256
        $region72: #{tpu_custom_call.1} parent=67 // pred_fallthru
          _
      $region68: #{tpu_custom_call.1} parent=5 // pred_fallthru
        _
    $region6: #{tpu_custom_call.1} parent=1 // loop_footer
      %s23 = sadd.s32 1, %s19
    $region7: #{tpu_custom_call.1} parent=1 // loop_footer_branch
      %18 = sbr.rel target = $region3
    $region8: #{tpu_custom_call.1} parent=1 // loop_exit
      _
    %1269 = vsyncpa [#allocation3], 1
    %s1270 = scalar_lea.sflag [#allocation3], 1
    %1271 = vsyncpa %s1270, 1

</llo_original>
